<compile_context>
chip_gen: v7x
topology: tpu7x:2x2x1
jax: 0.10.0
libtpu: 0.0.40
codegen_flags: <defaults>
</compile_context>

<pallas_src>
import functools

import jax
import jax.numpy as jnp
from jax import lax
from jax.experimental import pallas as pl
from jax.experimental.pallas import tpu as pltpu


def _barlow_kernel(z1_ref, z2_ref, loss_ref,
                   g1_acc, g2_acc, ondiag_acc, diagsq_acc,
                   *, n, lmbda, matmul_in_bf16):
    j = pl.program_id(0)

    @pl.when(j == 0)
    def _init():
        g1_acc[...] = jnp.zeros_like(g1_acc)
        g2_acc[...] = jnp.zeros_like(g2_acc)
        ondiag_acc[...] = jnp.zeros_like(ondiag_acc)
        diagsq_acc[...] = jnp.zeros_like(diagsq_acc)

    z1 = z1_ref[...].astype(jnp.float32)
    z2 = z2_ref[...].astype(jnp.float32)

    # Per-column standardization over the batch axis, with the 1/sqrt(n) of
    # `cor = z1n.T @ z2n / n` folded into the column scale:
    #   z_s = (z - mean) * rsqrt(ss * n / (n - 1))   (torch.std is unbiased)
    # so that cor == Z1s.T @ Z2s exactly (no d x d "/ n" pass afterwards).
    mean1 = jnp.mean(z1, axis=0, keepdims=True)
    mean2 = jnp.mean(z2, axis=0, keepdims=True)
    c1 = z1 - mean1
    c2 = z2 - mean2
    k = float(n) / float(n - 1)
    scale1 = lax.rsqrt(jnp.sum(c1 * c1, axis=0, keepdims=True) * k)
    scale2 = lax.rsqrt(jnp.sum(c2 * c2, axis=0, keepdims=True) * k)
    z1s = c1 * scale1
    z2s = c2 * scale2

    # Diagonal of cor for this column tile, directly on the VPU (no masks):
    #   cor_jj = sum_k z1s[k, j] * z2s[k, j]
    diag = jnp.sum(z1s * z2s, axis=0, keepdims=True)       # (1, td)
    ondiag_acc[...] += (diag - 1.0) ** 2                    # row accumulators;
    diagsq_acc[...] += diag * diag                          # lane-reduced once at the end

    # Gram accumulators:  sum(cor^2) == sum(G1 * G2),  G = Zs @ Zs.T
    if matmul_in_bf16:
        a1 = z1s.astype(jnp.bfloat16)
        a2 = z2s.astype(jnp.bfloat16)
    else:
        a1, a2 = z1s, z2s
    dn = (((1,), (1,)), ((), ()))        # contract over the feature (lane) axis
    g1_acc[...] += lax.dot_general(a1, a1, dn, preferred_element_type=jnp.float32)
    g2_acc[...] += lax.dot_general(a2, a2, dn, preferred_element_type=jnp.float32)

    @pl.when(j == pl.num_programs(0) - 1)
    def _finalize():
        on_diag = jnp.sum(ondiag_acc[...])
        frob = jnp.sum(g1_acc[...] * g2_acc[...])           # == sum(cor^2)
        off_diag = frob - jnp.sum(diagsq_acc[...])
        loss_ref[0, 0] = on_diag + lmbda * off_diag


def _pick_column_tile(d):
    for td in (512, 256, 128):
        if d % td == 0:
            return td
    return d  # d not a multiple of 128: use one full-width block


def barlow_loss(z1, z2, lmbda=0.005, reduction="mean",
                matmul_in_bf16=False, column_tile=None):
    if reduction != "mean":
        raise ValueError("only reduction='mean' is supported")
    n, d = z1.shape
    if z2.shape != (n, d):
        raise ValueError("z1 and z2 must have the same (n, d) shape")
    if n < 2:
        raise ValueError("need n >= 2 (unbiased std divides by n - 1)")

    if column_tile is None:
        td = _pick_column_tile(d)
    else:
        td = int(column_tile)
        if d % td != 0 or not (td % 128 == 0 or td == d):
            raise ValueError("column_tile must divide d and be a multiple of "
                             "128 (or equal d)")
    grid = (d // td,)

    # Conservative VMEM budget: 2 inputs x 2 pipeline buffers + scratch + slack.
    itemsize = max(jnp.dtype(z1.dtype).itemsize, jnp.dtype(z2.dtype).itemsize)
    vmem_est = 2 * 2 * n * td * itemsize + 2 * n * n * 4 + 2 * td * 4 + (1 << 20)
    vmem_limit = int(min(max(vmem_est, 16 << 20), 48 << 20))  # stays < v7x 64 MiB

    kernel = functools.partial(_barlow_kernel, n=n, lmbda=float(lmbda),
                               matmul_in_bf16=matmul_in_bf16)
    out = pl.pallas_call(
        kernel,
        out_shape=jax.ShapeDtypeStruct((1, 1), jnp.float32),
        grid_spec=pltpu.PrefetchScalarGridSpec(
            num_scalar_prefetch=0,
            grid=grid,
            in_specs=[
                pl.BlockSpec((n, td), lambda j: (0, j)),
                pl.BlockSpec((n, td), lambda j: (0, j)),
            ],
            out_specs=pl.BlockSpec((1, 1), lambda j: (0, 0),
                                   memory_space=pltpu.MemorySpace.SMEM),
            scratch_shapes=[
                pltpu.VMEM((n, n), jnp.float32),    # G1 = Z1s @ Z1s.T accumulator
                pltpu.VMEM((n, n), jnp.float32),    # G2 = Z2s @ Z2s.T accumulator
                pltpu.VMEM((1, td), jnp.float32),   # sum_j (cor_jj - 1)^2 (per lane)
                pltpu.VMEM((1, td), jnp.float32),   # sum_j cor_jj^2       (per lane)
            ],
        ),
        compiler_params=pltpu.CompilerParams(
            dimension_semantics=("arbitrary",),     # accumulation across column tiles
            vmem_limit_bytes=vmem_limit,
        ),
    )(z1, z2)
    return out[0, 0]


def _barlow_loss_ref(z1, z2, lmbda=0.005):
    # Pure-JAX reference mirroring the PyTorch forward.
    n, d = z1.shape
    z1 = (z1 - z1.mean(0)) / jnp.std(z1, axis=0, ddof=1)
    z2 = (z2 - z2.mean(0)) / jnp.std(z2, axis=0, ddof=1)
    cor = (z1.T @ z2) / n
    on_diag = jnp.sum((jnp.diagonal(cor) - 1.0) ** 2)
    off_diag = jnp.sum(cor ** 2) - jnp.sum(jnp.diagonal(cor) ** 2)
    return on_diag + lmbda * off_diag


if __name__ == "__main__":
    key = jax.random.PRNGKey(0)
    k1, k2, k3, k4 = jax.random.split(key, 4)

    # Tiny shape consistent with the module's forward (batch=8, feature=32).
    z1 = jax.random.normal(k1, (8, 32), dtype=jnp.float32)
    z2 = jax.random.normal(k2, (8, 32), dtype=jnp.float32)
    loss = barlow_loss(z1, z2, lmbda=0.005)
    jax.block_until_ready(loss)
    ref = _barlow_loss_ref(z1, z2, lmbda=0.005)
    assert jnp.allclose(loss, ref, rtol=1e-4, atol=1e-3), (loss, ref)

    # Larger feature dim exercising the column-tile grid + accumulators
    # (d=256, tile=128 -> 2 grid steps).
    z1b = jax.random.normal(k3, (16, 256), dtype=jnp.float32)
    z2b = jax.random.normal(k4, (16, 256), dtype=jnp.float32)
    loss_b = barlow_loss(z1b, z2b, lmbda=0.005, column_tile=128)
    jax.block_until_ready(loss_b)
    ref_b = _barlow_loss_ref(z1b, z2b, lmbda=0.005)
    assert jnp.allclose(loss_b, ref_b, rtol=1e-4, atol=1e-3), (loss_b, ref_b)

    # bf16-fed MXU path (f32 accumulation) — looser tolerance.
    loss_c = barlow_loss(z1b, z2b, lmbda=0.005, column_tile=128,
                         matmul_in_bf16=True)
    jax.block_until_ready(loss_c)
    assert jnp.allclose(loss_c, ref_b, rtol=2e-2, atol=2e-1), (loss_c, ref_b)

    print("KERNEL_OK")
</pallas_src>

<mosaic_0001>
module attributes {stable_mosaic.version = 11 : i64} {
  func.func @_barlow_kernel(%arg0: i32, %arg1: memref<8x32xf32, #tpu.memory_space<vmem>>, %arg2: memref<8x32xf32, #tpu.memory_space<vmem>>, %arg3: memref<1x1xf32, #tpu.memory_space<smem>>, %arg4: memref<8x8xf32, #tpu.memory_space<vmem>>, %arg5: memref<8x8xf32, #tpu.memory_space<vmem>>, %arg6: memref<1x32xf32, #tpu.memory_space<vmem>>, %arg7: memref<1x32xf32, #tpu.memory_space<vmem>>) attributes {dimension_semantics = [#tpu.dimension_semantics<arbitrary>], iteration_bounds = array<i64: 1>, scalar_prefetch = 0 : i64, scratch_operands = 4 : i64, tpu.core_type = #tpu.core_type<tc>, window_params = [{transform_indices = @transform_0, window_bounds = array<i64: 8, 32>}, {transform_indices = @transform_1, window_bounds = array<i64: 8, 32>}, {transform_indices = @transform_2, window_bounds = array<i64: 1, 1>}]} {
    %c0_i32 = arith.constant 0 : i32
    %0 = arith.cmpi eq, %arg0, %c0_i32 : i32
    %1 = arith.extui %0 : i1 to i32
    %c0_i32_0 = arith.constant 0 : i32
    %2 = arith.cmpi ne, %1, %c0_i32_0 : i32
    scf.if %2 {
      %cst_33 = arith.constant 0.000000e+00 : f32
      %57 = vector.broadcast %cst_33 : f32 to vector<8x8xf32>
      %c0_34 = arith.constant 0 : index
      %c0_35 = arith.constant 0 : index
      %58 = vector.load %arg4[%c0_34, %c0_35] : memref<8x8xf32, #tpu.memory_space<vmem>>, vector<8x8xf32>
      tpu.vector_store %arg4[%c0_34, %c0_35], %57 {strides = array<i32>} : memref<8x8xf32, #tpu.memory_space<vmem>>, vector<8x8xf32>,
      %cst_36 = arith.constant 0.000000e+00 : f32
      %59 = vector.broadcast %cst_36 : f32 to vector<8x8xf32>
      %c0_37 = arith.constant 0 : index
      %c0_38 = arith.constant 0 : index
      %60 = vector.load %arg5[%c0_37, %c0_38] : memref<8x8xf32, #tpu.memory_space<vmem>>, vector<8x8xf32>
      tpu.vector_store %arg5[%c0_37, %c0_38], %59 {strides = array<i32>} : memref<8x8xf32, #tpu.memory_space<vmem>>, vector<8x8xf32>,
      %cst_39 = arith.constant 0.000000e+00 : f32
      %61 = vector.broadcast %cst_39 : f32 to vector<1x32xf32>
      %c0_40 = arith.constant 0 : index
      %c0_41 = arith.constant 0 : index
      %62 = vector.load %arg6[%c0_40, %c0_41] : memref<1x32xf32, #tpu.memory_space<vmem>>, vector<1x32xf32>
      tpu.vector_store %arg6[%c0_40, %c0_41], %61 {strides = array<i32>} : memref<1x32xf32, #tpu.memory_space<vmem>>, vector<1x32xf32>,
      %cst_42 = arith.constant 0.000000e+00 : f32
      %63 = vector.broadcast %cst_42 : f32 to vector<1x32xf32>
      %c0_43 = arith.constant 0 : index
      %c0_44 = arith.constant 0 : index
      %64 = vector.load %arg7[%c0_43, %c0_44] : memref<1x32xf32, #tpu.memory_space<vmem>>, vector<1x32xf32>
      tpu.vector_store %arg7[%c0_43, %c0_44], %63 {strides = array<i32>} : memref<1x32xf32, #tpu.memory_space<vmem>>, vector<1x32xf32>,
    } else {
    }
    %c0 = arith.constant 0 : index
    %c0_1 = arith.constant 0 : index
    %3 = vector.load %arg1[%c0, %c0_1] : memref<8x32xf32, #tpu.memory_space<vmem>>, vector<8x32xf32>
    %c0_2 = arith.constant 0 : index
    %c0_3 = arith.constant 0 : index
    %4 = vector.load %arg2[%c0_2, %c0_3] : memref<8x32xf32, #tpu.memory_space<vmem>>, vector<8x32xf32>
    %cst = arith.constant dense<0.000000e+00> : vector<32xf32>
    %5 = vector.multi_reduction <add>, %3, %cst [0] : vector<8x32xf32> to vector<32xf32>
    %6 = vector.shape_cast %5 : vector<32xf32> to vector<1x32xf32>
    %cst_4 = arith.constant 8.000000e+00 : f32
    %7 = vector.broadcast %cst_4 : f32 to vector<1x32xf32>
    %8 = arith.divf %6, %7 : vector<1x32xf32>
    %cst_5 = arith.constant dense<0.000000e+00> : vector<32xf32>
    %9 = vector.multi_reduction <add>, %4, %cst_5 [0] : vector<8x32xf32> to vector<32xf32>
    %10 = vector.shape_cast %9 : vector<32xf32> to vector<1x32xf32>
    %cst_6 = arith.constant 8.000000e+00 : f32
    %11 = vector.broadcast %cst_6 : f32 to vector<1x32xf32>
    %12 = arith.divf %10, %11 : vector<1x32xf32>
    %13 = vector.broadcast %8 : vector<1x32xf32> to vector<8x32xf32>
    %14 = arith.subf %3, %13 : vector<8x32xf32>
    %15 = vector.broadcast %12 : vector<1x32xf32> to vector<8x32xf32>
    %16 = arith.subf %4, %15 : vector<8x32xf32>
    %17 = arith.mulf %14, %14 : vector<8x32xf32>
    %cst_7 = arith.constant dense<0.000000e+00> : vector<32xf32>
    %18 = vector.multi_reduction <add>, %17, %cst_7 [0] : vector<8x32xf32> to vector<32xf32>
    %19 = vector.shape_cast %18 : vector<32xf32> to vector<1x32xf32>
    %cst_8 = arith.constant 1.14285719 : f32
    %20 = vector.broadcast %cst_8 : f32 to vector<1x32xf32>
    %21 = arith.mulf %19, %20 : vector<1x32xf32>
    %22 = math.rsqrt %21 : vector<1x32xf32>
    %23 = arith.mulf %16, %16 : vector<8x32xf32>
    %cst_9 = arith.constant dense<0.000000e+00> : vector<32xf32>
    %24 = vector.multi_reduction <add>, %23, %cst_9 [0] : vector<8x32xf32> to vector<32xf32>
    %25 = vector.shape_cast %24 : vector<32xf32> to vector<1x32xf32>
    %cst_10 = arith.constant 1.14285719 : f32
    %26 = vector.broadcast %cst_10 : f32 to vector<1x32xf32>
    %27 = arith.mulf %25, %26 : vector<1x32xf32>
    %28 = math.rsqrt %27 : vector<1x32xf32>
    %29 = vector.broadcast %22 : vector<1x32xf32> to vector<8x32xf32>
    %30 = arith.mulf %14, %29 : vector<8x32xf32>
    %31 = vector.broadcast %28 : vector<1x32xf32> to vector<8x32xf32>
    %32 = arith.mulf %16, %31 : vector<8x32xf32>
    %33 = arith.mulf %30, %32 : vector<8x32xf32>
    %cst_11 = arith.constant dense<0.000000e+00> : vector<32xf32>
    %34 = vector.multi_reduction <add>, %33, %cst_11 [0] : vector<8x32xf32> to vector<32xf32>
    %35 = vector.shape_cast %34 : vector<32xf32> to vector<1x32xf32>
    %c0_12 = arith.constant 0 : index
    %c0_13 = arith.constant 0 : index
    %36 = vector.load %arg6[%c0_12, %c0_13] : memref<1x32xf32, #tpu.memory_space<vmem>>, vector<1x32xf32>
    %cst_14 = arith.constant 1.000000e+00 : f32
    %37 = vector.broadcast %cst_14 : f32 to vector<1x32xf32>
    %38 = arith.subf %35, %37 : vector<1x32xf32>
    %39 = arith.mulf %38, %38 : vector<1x32xf32>
    %40 = arith.addf %36, %39 : vector<1x32xf32>
    %c0_15 = arith.constant 0 : index
    %c0_16 = arith.constant 0 : index
    %41 = vector.load %arg6[%c0_15, %c0_16] : memref<1x32xf32, #tpu.memory_space<vmem>>, vector<1x32xf32>
    tpu.vector_store %arg6[%c0_15, %c0_16], %40 {strides = array<i32>} : memref<1x32xf32, #tpu.memory_space<vmem>>, vector<1x32xf32>,
    %c0_17 = arith.constant 0 : index
    %c0_18 = arith.constant 0 : index
    %42 = vector.load %arg7[%c0_17, %c0_18] : memref<1x32xf32, #tpu.memory_space<vmem>>, vector<1x32xf32>
    %43 = arith.mulf %35, %35 : vector<1x32xf32>
    %44 = arith.addf %42, %43 : vector<1x32xf32>
    %c0_19 = arith.constant 0 : index
    %c0_20 = arith.constant 0 : index
    %45 = vector.load %arg7[%c0_19, %c0_20] : memref<1x32xf32, #tpu.memory_space<vmem>>, vector<1x32xf32>
    tpu.vector_store %arg7[%c0_19, %c0_20], %44 {strides = array<i32>} : memref<1x32xf32, #tpu.memory_space<vmem>>, vector<1x32xf32>,
    %c0_21 = arith.constant 0 : index
    %c0_22 = arith.constant 0 : index
    %46 = vector.load %arg4[%c0_21, %c0_22] : memref<8x8xf32, #tpu.memory_space<vmem>>, vector<8x8xf32>
    %cst_23 = arith.constant dense<0.000000e+00> : vector<8x8xf32>
    %47 = tpu.matmul %30, %30, %cst_23 {dimension_numbers = #tpu.dot_dimension_numbers<[1], [1], [0], [0], [0, 0, 1, 0], [], []>} : vector<8x32xf32>, vector<8x32xf32>, vector<8x8xf32> -> vector<8x8xf32>
    %48 = arith.addf %46, %47 : vector<8x8xf32>
    %c0_24 = arith.constant 0 : index
    %c0_25 = arith.constant 0 : index
    %49 = vector.load %arg4[%c0_24, %c0_25] : memref<8x8xf32, #tpu.memory_space<vmem>>, vector<8x8xf32>
    tpu.vector_store %arg4[%c0_24, %c0_25], %48 {strides = array<i32>} : memref<8x8xf32, #tpu.memory_space<vmem>>, vector<8x8xf32>,
    %c0_26 = arith.constant 0 : index
    %c0_27 = arith.constant 0 : index
    %50 = vector.load %arg5[%c0_26, %c0_27] : memref<8x8xf32, #tpu.memory_space<vmem>>, vector<8x8xf32>
    %cst_28 = arith.constant dense<0.000000e+00> : vector<8x8xf32>
    %51 = tpu.matmul %32, %32, %cst_28 {dimension_numbers = #tpu.dot_dimension_numbers<[1], [1], [0], [0], [0, 0, 1, 0], [], []>} : vector<8x32xf32>, vector<8x32xf32>, vector<8x8xf32> -> vector<8x8xf32>
    %52 = arith.addf %50, %51 : vector<8x8xf32>
    %c0_29 = arith.constant 0 : index
    %c0_30 = arith.constant 0 : index
    %53 = vector.load %arg5[%c0_29, %c0_30] : memref<8x8xf32, #tpu.memory_space<vmem>>, vector<8x8xf32>
    tpu.vector_store %arg5[%c0_29, %c0_30], %52 {strides = array<i32>} : memref<8x8xf32, #tpu.memory_space<vmem>>, vector<8x8xf32>,
    %c0_i32_31 = arith.constant 0 : i32
    %54 = arith.cmpi eq, %arg0, %c0_i32_31 : i32
    %55 = arith.extui %54 : i1 to i32
    %c0_i32_32 = arith.constant 0 : i32
    %56 = arith.cmpi ne, %55, %c0_i32_32 : i32
    scf.if %56 {
      %c0_33 = arith.constant 0 : index
      %c0_34 = arith.constant 0 : index
      %57 = vector.load %arg6[%c0_33, %c0_34] : memref<1x32xf32, #tpu.memory_space<vmem>>, vector<1x32xf32>
      %58 = vector.shape_cast %57 : vector<1x32xf32> to vector<1x1x32xf32>
      %cst_35 = arith.constant dense<0.000000e+00> : vector<1xf32>
      %59 = vector.multi_reduction <add>, %58, %cst_35 [1, 2] : vector<1x1x32xf32> to vector<1xf32>
      %60 = vector.shape_cast %59 : vector<1xf32> to vector<1x1x1xf32>
      %61 = vector.extract %60[0, 0, 0] : f32 from vector<1x1x1xf32>
      %c0_36 = arith.constant 0 : index
      %c0_37 = arith.constant 0 : index
      %62 = vector.load %arg4[%c0_36, %c0_37] : memref<8x8xf32, #tpu.memory_space<vmem>>, vector<8x8xf32>
      %c0_38 = arith.constant 0 : index
      %c0_39 = arith.constant 0 : index
      %63 = vector.load %arg5[%c0_38, %c0_39] : memref<8x8xf32, #tpu.memory_space<vmem>>, vector<8x8xf32>
      %64 = arith.mulf %62, %63 : vector<8x8xf32>
      %65 = vector.shape_cast %64 : vector<8x8xf32> to vector<1x8x8xf32>
      %cst_40 = arith.constant dense<0.000000e+00> : vector<1xf32>
      %66 = vector.multi_reduction <add>, %65, %cst_40 [1, 2] : vector<1x8x8xf32> to vector<1xf32>
      %67 = vector.shape_cast %66 : vector<1xf32> to vector<1x1x1xf32>
      %68 = vector.extract %67[0, 0, 0] : f32 from vector<1x1x1xf32>
      %c0_41 = arith.constant 0 : index
      %c0_42 = arith.constant 0 : index
      %69 = vector.load %arg7[%c0_41, %c0_42] : memref<1x32xf32, #tpu.memory_space<vmem>>, vector<1x32xf32>
      %70 = vector.shape_cast %69 : vector<1x32xf32> to vector<1x1x32xf32>
      %cst_43 = arith.constant dense<0.000000e+00> : vector<1xf32>
      %71 = vector.multi_reduction <add>, %70, %cst_43 [1, 2] : vector<1x1x32xf32> to vector<1xf32>
      %72 = vector.shape_cast %71 : vector<1xf32> to vector<1x1x1xf32>
      %73 = vector.extract %72[0, 0, 0] : f32 from vector<1x1x1xf32>
      %74 = arith.subf %68, %73 : f32
      %cst_44 = arith.constant 5.000000e-03 : f32
      %75 = arith.mulf %cst_44, %74 : f32
      %76 = arith.addf %61, %75 : f32
      %c0_45 = arith.constant 0 : index
      %c0_46 = arith.constant 0 : index
      %77 = memref.load %arg3[%c0_45, %c0_46] : memref<1x1xf32, #tpu.memory_space<smem>>
      memref.store %76, %arg3[%c0_45, %c0_46] : memref<1x1xf32, #tpu.memory_space<smem>>
    } else {
    }
    return
  }
  func.func @transform_0(%arg0: i32) -> (i32, i32) {
    %c0_i32 = arith.constant 0 : i32
    %c0_i32_0 = arith.constant 0 : i32
    return %c0_i32, %arg0 : i32, i32
  }
  func.func @transform_1(%arg0: i32) -> (i32, i32) {
    %c0_i32 = arith.constant 0 : i32
    %c0_i32_0 = arith.constant 0 : i32
    return %c0_i32, %arg0 : i32, i32
  }
  func.func @transform_2(%arg0: i32) -> (i32, i32) {
    %c0_i32 = arith.constant 0 : i32
    %c0_i32_0 = arith.constant 0 : i32
    %c0_i32_1 = arith.constant 0 : i32
    return %c0_i32, %c0_i32_0 : i32, i32
  }
}

</mosaic_0001>

<llo_original>
// kernel: tpu_custom_call.1
$region0: #{tpu_custom_call.1}
  #allocation0 [shape = 'u32[]', space=smem, size = 0x4, offset = 0x4, fixed_abs, tag = 'smem constant byte address 0x4 - core index']
  #allocation1 [shape = 'u32[144,128]{1,0:T(1,128)}', space=vmem, size = 0x12000, scoped, tag = 'internal scratch']
  #allocation2 [shape = 'f32[8,8]{1,0:T(8,128)}', space=vmem, size = 0x1000, scoped, tag = 'scratch operand']
  #allocation3 [shape = 'f32[8,8]{1,0:T(8,128)}', space=vmem, size = 0x1000, scoped, tag = 'scratch operand']
  #allocation4 [shape = 'f32[1,32]{1,0:T(1,128)}', space=vmem, size = 0x200, scoped, tag = 'scratch operand']
  #allocation5 [shape = 'f32[1,32]{1,0:T(1,128)}', space=vmem, size = 0x200, scoped, tag = 'scratch operand']
  %s0 = inlined_call_operand.hbm [shape: f32[8,32], index: 0, kind: input, shape index: {}]
  %s1 = inlined_call_operand.hbm [shape: f32[8,32], index: 1, kind: input, shape index: {}]
  %s2 = inlined_call_operand.hbm [shape: f32[1,1], index: 2, kind: output, shape index: {}]
  %s3 = sld [smem:[#allocation0]]
  $region34: #{tpu_custom_call.1} parent=0
    _
  %s5 = ssub.s32 1, %s3
  %s6 = scalar_select 0, %s5, %s3
  $region1: #{tpu_custom_call.1} parent=0
    #allocation6 [shape = 'u8[4096]{0}', space=vmem, size = 0x1000, scoped, tag = 'input window, operand 0, single buffered']
    #allocation7 [shape = 's32[1]{0}', space=sflag, size = 0x4, scoped, tag = 'scoped memory for tpu_custom_call.1']
    #allocation8 [shape = 's32[1]{0}', space=sflag, size = 0x4, scoped, tag = 'scoped memory for tpu_custom_call.1']
    #allocation9 [shape = 'u8[4096]{0}', space=vmem, size = 0x1000, scoped, tag = 'input window, operand 1, single buffered']
    #allocation10 [shape = 's32[1]{0}', space=sflag, size = 0x4, scoped, tag = 'scoped memory for tpu_custom_call.1']
    #allocation11 [shape = 'u8[512]{0}', space=smem, size = 0x200, scoped, tag = 'output window, operand 0, single buffered']
    %7 = vsyncpa [#allocation7], 0
    %8 = vsyncpa [#allocation10], 0
    %9 = vsyncpa [#allocation8], 0
    // Predicated region
    $region2: #{tpu_custom_call.1} parent=1 // pred_check
      _
    $region3: #{tpu_custom_call.1} parent=1 // pred_check_branch
      %11 = sbr.rel (0) target = $region5
    $region4: #{tpu_custom_call.1} parent=1 // pred_region
      %s13 = ssub.s32 128, 128
      %14 = vsyncadd [#allocation7], %s13
      %s16 = sshll.u32 [#allocation6], 4
      %s17 = int_to_ptr.vmem [resolvable:$true] %s16
      %19 = dma.hbm_to_vmem [thread:$0]  %s0, 128, %s17, [#allocation7]
    $region5: #{tpu_custom_call.1} parent=1 // pred_fallthru
      _
    // Predicated region
    $region6: #{tpu_custom_call.1} parent=1 // pred_check
      _
    $region7: #{tpu_custom_call.1} parent=1 // pred_check_branch
      %21 = sbr.rel (0) target = $region9
    $region8: #{tpu_custom_call.1} parent=1 // pred_region
      %s23 = ssub.s32 128, 128
      %24 = vsyncadd [#allocation10], %s23
      %s26 = sshll.u32 [#allocation9], 4
      %s27 = int_to_ptr.vmem [resolvable:$true] %s26
      %29 = dma.hbm_to_vmem [thread:$0]  %s1, 128, %s27, [#allocation10]
    $region9: #{tpu_custom_call.1} parent=1 // pred_fallthru
      _
    // Predicated region
    $region10: #{tpu_custom_call.1} parent=1 // pred_check
      _
    $region11: #{tpu_custom_call.1} parent=1 // pred_check_branch
      %31 = sbr.rel (0) target = $region13
    $region12: #{tpu_custom_call.1} parent=1 // pred_region
      %32 = dma.done [#allocation7], 128
    $region13: #{tpu_custom_call.1} parent=1 // pred_fallthru
      _
    // Predicated region
    $region14: #{tpu_custom_call.1} parent=1 // pred_check
      _
    $region15: #{tpu_custom_call.1} parent=1 // pred_check_branch
      %34 = sbr.rel (0) target = $region17
    $region16: #{tpu_custom_call.1} parent=1 // pred_region
      %35 = dma.done [#allocation10], 128
    $region17: #{tpu_custom_call.1} parent=1 // pred_fallthru
      _
    %p36 = scmp.eq.s32.totalorder 0, 0
    // Predicated region
    $region18: #{tpu_custom_call.1} parent=1 // pred_check
      %p37 = pneg %p36
    $region19: #{tpu_custom_call.1} parent=1 // pred_check_branch
      %39 = sbr.rel (%p37) target = $region21
    $region20: #{tpu_custom_call.1} parent=1 // pred_region
      %vm40 = vcmask 64512
      %41 = vst.msk [vmem:[#allocation2] sm:$0xff] %vm40, 0.0
      %42 = vst.msk [vmem:[#allocation3] sm:$0xff] %vm40, 0.0
      %vm43 = vcmask 253952
      %44 = vst.msk [vmem:[#allocation4] sm:$0x1] %vm43, 0.0
      %45 = vst.msk [vmem:[#allocation5] sm:$0x1] %vm43, 0.0
    $region21: #{tpu_custom_call.1} parent=1 // pred_fallthru
      _
    %v46 = vld [vmem:[#allocation6] sm:$0xff]
    %v47 = vld [vmem:[#allocation9] sm:$0xff]
    %vm48 = vcmask 261120
    %v49 = vsel %vm48, %v46, 0.0
    %v50 = vrot.slane %v49, 4
    %v51 = vadd.f32 %v49, %v50
    %v52 = vrot.slane %v51, 2
    %v53 = vadd.f32 %v51, %v52
    %v54 = vrot.slane %v53, 1
    %v55 = vadd.f32 %v53, %v54
    %v56 = vrcp.pop 8.0
    %v57 = vmul.f32 %v55, %v56
    %v58 = vsel %vm48, %v47, 0.0
    %v59 = vrot.slane %v58, 4
    %v60 = vadd.f32 %v58, %v59
    %v61 = vrot.slane %v60, 2
    %v62 = vadd.f32 %v60, %v61
    %v63 = vrot.slane %v62, 1
    %v64 = vadd.f32 %v62, %v63
    %v65 = vmul.f32 %v64, %v56
    %v66 = vsub.f32 %v46, %v57
    %v67 = vsub.f32 %v47, %v65
    %v68 = vmul.f32 %v66, %v66
    %v69 = vsel %vm48, %v68, 0.0
    %v70 = vrot.slane %v69, 4
    %v71 = vadd.f32 %v69, %v70
    %v72 = vrot.slane %v71, 2
    %v73 = vadd.f32 %v71, %v72
    %v74 = vrot.slane %v73, 1
    %v75 = vadd.f32 %v73, %v74
    %v76 = vmul.f32 %v75, 1.1428572
    %v77 = vrsqrt.pop %v76
    %v78 = vmul.f32 %v67, %v67
    %v79 = vsel %vm48, %v78, 0.0
    %v80 = vrot.slane %v79, 4
    %v81 = vadd.f32 %v79, %v80
    %v82 = vrot.slane %v81, 2
    %v83 = vadd.f32 %v81, %v82
    %v84 = vrot.slane %v83, 1
    %v85 = vadd.f32 %v83, %v84
    %v86 = vmul.f32 %v85, 1.1428572
    %v87 = vrsqrt.pop %v86
    %v88 = vmul.f32 %v66, %v77
    %v89 = vmul.f32 %v67, %v87
    %v90 = vmul.f32 %v88, %v89
    %v91 = vsel %vm48, %v90, 0.0
    %v92 = vrot.slane %v91, 4
    %v93 = vadd.f32 %v91, %v92
    %v94 = vrot.slane %v93, 2
    %v95 = vadd.f32 %v93, %v94
    %v96 = vrot.slane %v95, 1
    %v97 = vadd.f32 %v95, %v96
    %v98 = vld [vmem:[#allocation4] sm:$0x1]
    %v99 = vsub.f32 %v97, 1.0
    %v100 = vmul.f32 %v99, %v99
    %v101 = vadd.f32 %v98, %v100
    %vm102 = vcmask 253952
    %103 = vst.msk [vmem:[#allocation4] sm:$0x1] %vm102, %v101
    %v104 = vld [vmem:[#allocation5] sm:$0x1]
    %v105 = vmul.f32 %v97, %v97
    %v106 = vadd.f32 %v104, %v105
    %107 = vst.msk [vmem:[#allocation5] sm:$0x1] %vm102, %v106
    %v108 = vld [vmem:[#allocation2] sm:$0xff]
    %v110 = vsel %vm48, %v88, 0
    %112 = vmatprep.subr.mxu0 0.0
    %113 = vmatpush1.xpose.msra.mxu0 %v110
    %114 = vmatprep.subr.mxu0 0.0
    %115 = vmatpush1.xpose.msra.mxu0 0.0
    %116 = vmatprep.subr.mxu0 0.0
    %117 = vmatpush1.xpose.msra.mxu0 0.0
    %118 = vmatprep.subr.mxu0 0.0
    %119 = vmatpush1.xpose.msra.mxu0 0.0
    %120 = vmatprep.subr.mxu0 0.0
    %121 = vmatpush1.xpose.msra.mxu0 0.0
    %122 = vmatprep.subr.mxu0 0.0
    %123 = vmatpush1.xpose.msra.mxu0 0.0
    %124 = vmatprep.subr.mxu0 0.0
    %125 = vmatpush1.xpose.msra.mxu0 0.0
    %126 = vmatprep.subr.mxu0 0.0
    %127 = vmatpush1.xpose.msra.mxu0 0.0
    %128 = vmatprep.subr.mxu0 0.0
    %129 = vmatpush1.xpose.msra.mxu0 0.0
    %130 = vmatprep.subr.mxu0 0.0
    %131 = vmatpush1.xpose.msra.mxu0 0.0
    %132 = vmatprep.subr.mxu0 0.0
    %133 = vmatpush1.xpose.msra.mxu0 0.0
    %134 = vmatprep.subr.mxu0 0.0
    %135 = vmatpush1.xpose.msra.mxu0 0.0
    %136 = vmatprep.subr.mxu0 0.0
    %137 = vmatpush1.xpose.msra.mxu0 0.0
    %138 = vmatprep.subr.mxu0 0.0
    %139 = vmatpush1.xpose.msra.mxu0 0.0
    %140 = vmatprep.subr.mxu0 0.0
    %141 = vmatpush1.xpose.msra.mxu0 0.0
    %142 = vmatprep.subr.mxu0 0.0
    %143 = vmatpush1.xpose.msra.mxu0 0.0
    %144 = vmatprep.subr.mxu0 0.0
    %145 = vmatpush1.xpose.msra.mxu0 0.0
    %146 = vmatprep.subr.mxu0 0.0
    %147 = vmatpush1.xpose.msra.mxu0 0.0
    %148 = vmatprep.subr.mxu0 0.0
    %149 = vmatpush1.xpose.msra.mxu0 0.0
    %150 = vmatprep.subr.mxu0 0.0
    %151 = vmatpush1.xpose.msra.mxu0 0.0
    %152 = vmatprep.subr.mxu0 0.0
    %153 = vmatpush1.xpose.msra.mxu0 0.0
    %154 = vmatprep.subr.mxu0 0.0
    %155 = vmatpush1.xpose.msra.mxu0 0.0
    %156 = vmatprep.subr.mxu0 0.0
    %157 = vmatpush1.xpose.msra.mxu0 0.0
    %158 = vmatprep.subr.mxu0 0.0
    %159 = vmatpush1.xpose.msra.mxu0 0.0
    %160 = vmatprep.subr.mxu0 0.0
    %161 = vmatpush1.xpose.msra.mxu0 0.0
    %162 = vmatprep.subr.mxu0 0.0
    %163 = vmatpush1.xpose.msra.mxu0 0.0
    %164 = vmatprep.subr.mxu0 0.0
    %165 = vmatpush1.xpose.msra.mxu0 0.0
    %166 = vmatprep.subr.mxu0 0.0
    %167 = vmatpush1.xpose.msra.mxu0 0.0
    %168 = vmatprep.subr.mxu0 0.0
    %169 = vmatpush1.xpose.msra.mxu0 0.0
    %170 = vmatprep.subr.mxu0 0.0
    %171 = vmatpush1.xpose.msra.mxu0 0.0
    %172 = vmatprep.subr.mxu0 0.0
    %173 = vmatpush1.xpose.msra.mxu0 0.0
    %174 = vmatprep.subr.mxu0 0.0
    %175 = vmatpush1.xpose.msra.mxu0 0.0
    %176 = vmatprep.mubr.f32.mxu0 0.0
    %177 = vmatmul.mubr.f32.gmra.mrb[0].mxu0 %v110
    %v178 = vpop.f32.mrb[0].mxu0
    %v179 = vadd.f32 0.0, %v178
    %v180 = vpop.f32.mrb[0].mxu0
    %181 = vdwg.mxu0
    %v182 = vadd.f32 %v108, %v179
    %vm183 = vcmask 64512
    %184 = vst.msk [vmem:[#allocation2] sm:$0xff] %vm183, %v182
    %v185 = vld [vmem:[#allocation3] sm:$0xff]
    %v187 = vsel %vm48, %v89, 0
    %189 = vmatprep.subr.mxu0 0.0
    %190 = vmatpush1.xpose.msra.mxu0 %v187
    %191 = vmatprep.subr.mxu0 0.0
    %192 = vmatpush1.xpose.msra.mxu0 0.0
    %193 = vmatprep.subr.mxu0 0.0
    %194 = vmatpush1.xpose.msra.mxu0 0.0
    %195 = vmatprep.subr.mxu0 0.0
    %196 = vmatpush1.xpose.msra.mxu0 0.0
    %197 = vmatprep.subr.mxu0 0.0
    %198 = vmatpush1.xpose.msra.mxu0 0.0
    %199 = vmatprep.subr.mxu0 0.0
    %200 = vmatpush1.xpose.msra.mxu0 0.0
    %201 = vmatprep.subr.mxu0 0.0
    %202 = vmatpush1.xpose.msra.mxu0 0.0
    %203 = vmatprep.subr.mxu0 0.0
    %204 = vmatpush1.xpose.msra.mxu0 0.0
    %205 = vmatprep.subr.mxu0 0.0
    %206 = vmatpush1.xpose.msra.mxu0 0.0
    %207 = vmatprep.subr.mxu0 0.0
    %208 = vmatpush1.xpose.msra.mxu0 0.0
    %209 = vmatprep.subr.mxu0 0.0
    %210 = vmatpush1.xpose.msra.mxu0 0.0
    %211 = vmatprep.subr.mxu0 0.0
    %212 = vmatpush1.xpose.msra.mxu0 0.0
    %213 = vmatprep.subr.mxu0 0.0
    %214 = vmatpush1.xpose.msra.mxu0 0.0
    %215 = vmatprep.subr.mxu0 0.0
    %216 = vmatpush1.xpose.msra.mxu0 0.0
    %217 = vmatprep.subr.mxu0 0.0
    %218 = vmatpush1.xpose.msra.mxu0 0.0
    %219 = vmatprep.subr.mxu0 0.0
    %220 = vmatpush1.xpose.msra.mxu0 0.0
    %221 = vmatprep.subr.mxu0 0.0
    %222 = vmatpush1.xpose.msra.mxu0 0.0
    %223 = vmatprep.subr.mxu0 0.0
    %224 = vmatpush1.xpose.msra.mxu0 0.0
    %225 = vmatprep.subr.mxu0 0.0
    %226 = vmatpush1.xpose.msra.mxu0 0.0
    %227 = vmatprep.subr.mxu0 0.0
    %228 = vmatpush1.xpose.msra.mxu0 0.0
    %229 = vmatprep.subr.mxu0 0.0
    %230 = vmatpush1.xpose.msra.mxu0 0.0
    %231 = vmatprep.subr.mxu0 0.0
    %232 = vmatpush1.xpose.msra.mxu0 0.0
    %233 = vmatprep.subr.mxu0 0.0
    %234 = vmatpush1.xpose.msra.mxu0 0.0
    %235 = vmatprep.subr.mxu0 0.0
    %236 = vmatpush1.xpose.msra.mxu0 0.0
    %237 = vmatprep.subr.mxu0 0.0
    %238 = vmatpush1.xpose.msra.mxu0 0.0
    %239 = vmatprep.subr.mxu0 0.0
    %240 = vmatpush1.xpose.msra.mxu0 0.0
    %241 = vmatprep.subr.mxu0 0.0
    %242 = vmatpush1.xpose.msra.mxu0 0.0
    %243 = vmatprep.subr.mxu0 0.0
    %244 = vmatpush1.xpose.msra.mxu0 0.0
    %245 = vmatprep.subr.mxu0 0.0
    %246 = vmatpush1.xpose.msra.mxu0 0.0
    %247 = vmatprep.subr.mxu0 0.0
    %248 = vmatpush1.xpose.msra.mxu0 0.0
    %249 = vmatprep.subr.mxu0 0.0
    %250 = vmatpush1.xpose.msra.mxu0 0.0
    %251 = vmatprep.subr.mxu0 0.0
    %252 = vmatpush1.xpose.msra.mxu0 0.0
    %253 = vmatprep.mubr.f32.mxu0 0.0
    %254 = vmatmul.mubr.f32.gmra.mrb[0].mxu0 %v187
    %v255 = vpop.f32.mrb[0].mxu0
    %v256 = vadd.f32 0.0, %v255
    %v257 = vpop.f32.mrb[0].mxu0
    %258 = vdwg.mxu0
    %v259 = vadd.f32 %v185, %v256
    %260 = vst.msk [vmem:[#allocation3] sm:$0xff] %vm183, %v259
    // Predicated region
    $region22: #{tpu_custom_call.1} parent=1 // pred_check
      %p261 = pneg %p36
    $region23: #{tpu_custom_call.1} parent=1 // pred_check_branch
      %263 = sbr.rel (%p261) target = $region25
    $region24: #{tpu_custom_call.1} parent=1 // pred_region
      %v264 = vld [vmem:[#allocation4] sm:$0x1]
      %v265 = vsel %vm102, %v264, 0.0
      %266 = vadd.xlane.f32.xlu0 %v265
      %v267 = vpop.xlane.xlu0 %266
      %v268 = vrot.slane %v267, 4
      %v269 = vadd.f32 %v267, %v268
      %v270 = vrot.slane %v269, 2
      %v271 = vadd.f32 %v269, %v270
      %v272 = vrot.slane %v271, 1
      %v273 = vadd.f32 %v271, %v272
      %s274 = vtos %v273
      %v275 = vld [vmem:[#allocation2] sm:$0xff]
      %v276 = vld [vmem:[#allocation3] sm:$0xff]
      %v277 = vmul.f32 %v275, %v276
      %v278 = vsel %vm183, %v277, 0.0
      %279 = vadd.xlane.f32.xlu0 %v278
      %v280 = vpop.xlane.xlu0 %279
      %v281 = vrot.slane %v280, 4
      %v282 = vadd.f32 %v280, %v281
      %v283 = vrot.slane %v282, 2
      %v284 = vadd.f32 %v282, %v283
      %v285 = vrot.slane %v284, 1
      %v286 = vadd.f32 %v284, %v285
      %s287 = vtos %v286
      %v288 = vld [vmem:[#allocation5] sm:$0x1]
      %v289 = vsel %vm102, %v288, 0.0
      %290 = vadd.xlane.f32.xlu0 %v289
      %v291 = vpop.xlane.xlu0 %290
      %v292 = vrot.slane %v291, 4
      %v293 = vadd.f32 %v291, %v292
      %v294 = vrot.slane %v293, 2
      %v295 = vadd.f32 %v293, %v294
      %v296 = vrot.slane %v295, 1
      %v297 = vadd.f32 %v295, %v296
      %s298 = vtos %v297
      %s299 = ssub.f32 %s287, %s298
      %s300 = smul.f32 %s299, 0.005
      %s301 = sadd.f32 %s274, %s300
      %s302 = scalar_lea.smem [#allocation11], 0
      %303 = sst [smem:[%s302]] %s301
    $region25: #{tpu_custom_call.1} parent=1 // pred_fallthru
      _
    // Predicated region
    $region26: #{tpu_custom_call.1} parent=1 // pred_check
      _
    $region27: #{tpu_custom_call.1} parent=1 // pred_check_branch
      %305 = sbr.rel (0) target = $region29
    $region28: #{tpu_custom_call.1} parent=1 // pred_region
      %s307 = ssub.s32 16, 16
      %308 = vsyncadd [#allocation8], %s307
      %311 = dma.smem_to_hbm [#allocation11], 16, %s2, [#allocation8]
    $region29: #{tpu_custom_call.1} parent=1 // pred_fallthru
      _
    // Predicated region
    $region30: #{tpu_custom_call.1} parent=1 // pred_check
      _
    $region31: #{tpu_custom_call.1} parent=1 // pred_check_branch
      %313 = sbr.rel (0) target = $region33
    $region32: #{tpu_custom_call.1} parent=1 // pred_region
      %314 = dma.done [#allocation8], 16
    $region33: #{tpu_custom_call.1} parent=1 // pred_fallthru
      _
    %315 = sfence
    %316 = vsyncpa [#allocation7], 1
    %317 = vsyncpa [#allocation10], 1
    %318 = vsyncpa [#allocation8], 1

</llo_original>
